<compile_context>
chip_gen: v7x
topology: tpu7x:2x2x1
jax: 0.10.0
libtpu: 0.0.40
codegen_flags: <defaults>
</compile_context>

<pallas_src>
import functools

import jax
import jax.numpy as jnp
from jax.experimental import pallas as pl
from jax.experimental.pallas import tpu as pltpu


def _avgpool_kernel(x_ref, o_ref, pad_ref, *, k, pad, h, w, out_h, out_w,
                    recursions):
    # x_ref:   (T, h, w)            input tile
    # o_ref:   (T, out_h, out_w)    output tile
    # pad_ref: (T, h+2p, w+2p) f32  zero-padded workspace (VMEM scratch)
    inv = 1.0 / float(k * k)
    # Zero the whole workspace once; borders stay zero across fused recursions.
    pad_ref[...] = jnp.zeros_like(pad_ref)
    cur = x_ref[...].astype(jnp.float32)
    for _ in range(recursions):
        # Place the current image in the interior (static slice store).
        pad_ref[:, pad:pad + h, pad:pad + w] = cur
        xp = pad_ref[...]
        # Horizontal (lane) pass: k shifted adds -> per-row window sums.
        rows = xp[:, :, 0:out_w]
        for dj in range(1, k):
            rows = rows + xp[:, :, dj:dj + out_w]
        # Vertical (sublane) pass: k shifted adds of the row sums.
        acc = rows[:, 0:out_h, :]
        for di in range(1, k):
            acc = acc + rows[:, di:di + out_h, :]
        cur = acc * inv                           # count_include_pad=True
    o_ref[...] = cur.astype(o_ref.dtype)


def _pick_bc_tile(bc, target=8):
    """Largest divisor of bc that is <= target while keeping >= 2 grid steps."""
    if bc <= 1:
        return 1
    best = 1
    for d in range(1, min(bc, target) + 1):
        if bc % d == 0 and bc // d >= 2:
            best = d
    return best


def avg_pool2d_pallas(img, *, kernel_size=5, pad=2, recursions=1):
    """AvgPool2d(k, stride=1, padding=pad, count_include_pad=True) applied
    `recursions` times (fused into one kernel when output size == input)."""
    b, c, h, w = img.shape
    k = kernel_size
    out_h = h + 2 * pad - (k - 1)
    out_w = w + 2 * pad - (k - 1)
    assert out_h >= 1 and out_w >= 1, "kernel larger than (padded) input"
    assert recursions == 1 or (out_h == h and out_w == w), (
        "fused recursions require same-size (stride=1, symmetric-pad) pooling")

    bc = b * c
    x = img.reshape(bc, h, w)              # metadata-only reshape, no HBM copy
    tile_bc = _pick_bc_tile(bc, target=8)
    grid = (bc // tile_bc,)

    kernel = functools.partial(
        _avgpool_kernel, k=k, pad=pad, h=h, w=w, out_h=out_h, out_w=out_w,
        recursions=recursions)

    out = pl.pallas_call(
        kernel,
        out_shape=jax.ShapeDtypeStruct((bc, out_h, out_w), img.dtype),
        grid_spec=pltpu.PrefetchScalarGridSpec(
            num_scalar_prefetch=0,
            grid=grid,
            in_specs=[pl.BlockSpec((tile_bc, h, w), lambda i: (i, 0, 0))],
            out_specs=pl.BlockSpec((tile_bc, out_h, out_w),
                                   lambda i: (i, 0, 0)),
            scratch_shapes=[
                pltpu.VMEM((tile_bc, h + 2 * pad, w + 2 * pad), jnp.float32),
            ],
        ),
        compiler_params=pltpu.CompilerParams(
            dimension_semantics=("parallel",),
        ),
    )(x)
    return out.reshape(b, c, out_h, out_w)


def filter_low(img, recursions=1, kernel_size=5, padding=True):
    """FilterLow.forward (gaussian=False -> AvgPool2d path)."""
    # TODO(synk): gaussian=True path (depthwise Gaussian Conv2d) not implemented;
    # the default FilterLow config uses AvgPool2d.
    pad = (kernel_size - 1) // 2 if padding else 0
    same_size = (2 * pad == kernel_size - 1)
    if same_size:
        # Fuse all recursions into one kernel pass (data stays in VMEM).
        return avg_pool2d_pallas(img, kernel_size=kernel_size, pad=pad,
                                 recursions=recursions)
    # padding=False: output shrinks each recursion -> one call per recursion.
    for _ in range(recursions):
        img = avg_pool2d_pallas(img, kernel_size=kernel_size, pad=pad,
                                recursions=1)
    return img


def _reference_avgpool(img, kernel_size=5, pad=2):
    # Pure-JAX reference (same semantics) for a sanity check.
    k = kernel_size
    b, c, h, w = img.shape
    out_h = h + 2 * pad - (k - 1)
    out_w = w + 2 * pad - (k - 1)
    xpad = jnp.pad(img, ((0, 0), (0, 0), (pad, pad), (pad, pad)))
    acc = jnp.zeros((b, c, out_h, out_w), jnp.float32)
    for di in range(k):
        for dj in range(k):
            acc = acc + xpad[:, :, di:di + out_h, dj:dj + out_w].astype(jnp.float32)
    return (acc / float(k * k)).astype(img.dtype)


if __name__ == "__main__":
    key = jax.random.PRNGKey(0)
    x = jax.random.normal(key, (2, 4, 16, 16), dtype=jnp.float32)  # NCHW

    out = filter_low(x, recursions=1, kernel_size=5, padding=True)
    out = jax.block_until_ready(out)

    ref = _reference_avgpool(x, kernel_size=5, pad=2)
    assert out.shape == x.shape
    assert jnp.allclose(out, ref, atol=1e-5, rtol=1e-5)

    print("KERNEL_OK")
</pallas_src>

<mosaic_0001>
module attributes {stable_mosaic.version = 11 : i64} {
  func.func @_avgpool_kernel(%arg0: i32, %arg1: memref<4x16x16xf32, #tpu.memory_space<vmem>>, %arg2: memref<4x16x16xf32, #tpu.memory_space<vmem>>, %arg3: memref<4x20x20xf32, #tpu.memory_space<vmem>>) attributes {dimension_semantics = [#tpu.dimension_semantics<parallel>], iteration_bounds = array<i64: 2>, scalar_prefetch = 0 : i64, scratch_operands = 1 : i64, tpu.core_type = #tpu.core_type<tc>, window_params = [{transform_indices = @transform_0, window_bounds = array<i64: 4, 16, 16>}, {transform_indices = @transform_1, window_bounds = array<i64: 4, 16, 16>}]} {
    %cst = arith.constant 0.000000e+00 : f32
    %0 = vector.broadcast %cst : f32 to vector<4x20x20xf32>
    %c0 = arith.constant 0 : index
    %c0_0 = arith.constant 0 : index
    %c0_1 = arith.constant 0 : index
    %1 = vector.load %arg3[%c0, %c0_0, %c0_1] : memref<4x20x20xf32, #tpu.memory_space<vmem>>, vector<4x20x20xf32>
    tpu.vector_store %arg3[%c0, %c0_0, %c0_1], %0 {strides = array<i32>} : memref<4x20x20xf32, #tpu.memory_space<vmem>>, vector<4x20x20xf32>,
    %c0_2 = arith.constant 0 : index
    %c0_3 = arith.constant 0 : index
    %c0_4 = arith.constant 0 : index
    %2 = vector.load %arg1[%c0_2, %c0_3, %c0_4] : memref<4x16x16xf32, #tpu.memory_space<vmem>>, vector<4x16x16xf32>
    %c0_5 = arith.constant 0 : index
    %c2 = arith.constant 2 : index
    %c2_6 = arith.constant 2 : index
    %3 = vector.load %arg3[%c0_5, %c2, %c2_6] : memref<4x20x20xf32, #tpu.memory_space<vmem>>, vector<4x16x16xf32>
    tpu.vector_store %arg3[%c0_5, %c2, %c2_6], %2 {strides = array<i32>} : memref<4x20x20xf32, #tpu.memory_space<vmem>>, vector<4x16x16xf32>,
    %c0_7 = arith.constant 0 : index
    %c0_8 = arith.constant 0 : index
    %c0_9 = arith.constant 0 : index
    %4 = vector.load %arg3[%c0_7, %c0_8, %c0_9] : memref<4x20x20xf32, #tpu.memory_space<vmem>>, vector<4x20x20xf32>
    %5 = vector.extract_strided_slice %4 {offsets = [0, 0, 0], sizes = [4, 20, 16], strides = [1, 1, 1]} : vector<4x20x20xf32> to vector<4x20x16xf32>
    %6 = vector.extract_strided_slice %4 {offsets = [0, 0, 1], sizes = [4, 20, 16], strides = [1, 1, 1]} : vector<4x20x20xf32> to vector<4x20x16xf32>
    %7 = arith.addf %5, %6 : vector<4x20x16xf32>
    %8 = vector.extract_strided_slice %4 {offsets = [0, 0, 2], sizes = [4, 20, 16], strides = [1, 1, 1]} : vector<4x20x20xf32> to vector<4x20x16xf32>
    %9 = arith.addf %7, %8 : vector<4x20x16xf32>
    %10 = vector.extract_strided_slice %4 {offsets = [0, 0, 3], sizes = [4, 20, 16], strides = [1, 1, 1]} : vector<4x20x20xf32> to vector<4x20x16xf32>
    %11 = arith.addf %9, %10 : vector<4x20x16xf32>
    %12 = vector.extract_strided_slice %4 {offsets = [0, 0, 4], sizes = [4, 20, 16], strides = [1, 1, 1]} : vector<4x20x20xf32> to vector<4x20x16xf32>
    %13 = arith.addf %11, %12 : vector<4x20x16xf32>
    %14 = vector.extract_strided_slice %13 {offsets = [0, 0, 0], sizes = [4, 16, 16], strides = [1, 1, 1]} : vector<4x20x16xf32> to vector<4x16x16xf32>
    %15 = vector.extract_strided_slice %13 {offsets = [0, 1, 0], sizes = [4, 16, 16], strides = [1, 1, 1]} : vector<4x20x16xf32> to vector<4x16x16xf32>
    %16 = arith.addf %14, %15 : vector<4x16x16xf32>
    %17 = vector.extract_strided_slice %13 {offsets = [0, 2, 0], sizes = [4, 16, 16], strides = [1, 1, 1]} : vector<4x20x16xf32> to vector<4x16x16xf32>
    %18 = arith.addf %16, %17 : vector<4x16x16xf32>
    %19 = vector.extract_strided_slice %13 {offsets = [0, 3, 0], sizes = [4, 16, 16], strides = [1, 1, 1]} : vector<4x20x16xf32> to vector<4x16x16xf32>
    %20 = arith.addf %18, %19 : vector<4x16x16xf32>
    %21 = vector.extract_strided_slice %13 {offsets = [0, 4, 0], sizes = [4, 16, 16], strides = [1, 1, 1]} : vector<4x20x16xf32> to vector<4x16x16xf32>
    %22 = arith.addf %20, %21 : vector<4x16x16xf32>
    %cst_10 = arith.constant 4.000000e-02 : f32
    %23 = vector.broadcast %cst_10 : f32 to vector<4x16x16xf32>
    %24 = arith.mulf %22, %23 : vector<4x16x16xf32>
    %c0_11 = arith.constant 0 : index
    %c0_12 = arith.constant 0 : index
    %c0_13 = arith.constant 0 : index
    %25 = vector.load %arg2[%c0_11, %c0_12, %c0_13] : memref<4x16x16xf32, #tpu.memory_space<vmem>>, vector<4x16x16xf32>
    tpu.vector_store %arg2[%c0_11, %c0_12, %c0_13], %24 {strides = array<i32>} : memref<4x16x16xf32, #tpu.memory_space<vmem>>, vector<4x16x16xf32>,
    return
  }
  func.func @transform_0(%arg0: i32) -> (i32, i32, i32) {
    %c0_i32 = arith.constant 0 : i32
    %c0_i32_0 = arith.constant 0 : i32
    %c0_i32_1 = arith.constant 0 : i32
    return %arg0, %c0_i32, %c0_i32_0 : i32, i32, i32
  }
  func.func @transform_1(%arg0: i32) -> (i32, i32, i32) {
    %c0_i32 = arith.constant 0 : i32
    %c0_i32_0 = arith.constant 0 : i32
    %c0_i32_1 = arith.constant 0 : i32
    return %arg0, %c0_i32, %c0_i32_0 : i32, i32, i32
  }
}

</mosaic_0001>

<llo_original>
// kernel: tpu_custom_call.1
$region0: #{tpu_custom_call.1}
  #allocation0 [shape = 'u32[]', space=smem, size = 0x4, offset = 0x4, fixed_abs, tag = 'smem constant byte address 0x4 - core index']
  #allocation1 [shape = 'u32[144,128]{1,0:T(1,128)}', space=vmem, size = 0x12000, scoped, tag = 'internal scratch']
  #allocation2 [shape = 'f32[4,20,20]{2,1,0:T(8,128)}', space=vmem, size = 0xc000, scoped, tag = 'scratch operand']
  %s0 = inlined_call_operand.hbm [shape: f32[8,16,16], index: 0, kind: input, shape index: {}]
  %s1 = inlined_call_operand.hbm [shape: f32[8,16,16], index: 1, kind: output, shape index: {}]
  %s2 = sld [smem:[#allocation0]]
  $region41: #{tpu_custom_call.1} parent=0
    _
  %s4 = ssub.s32 1, %s2
  %s5 = scalar_select 0, %s4, %s2
  $region1: #{tpu_custom_call.1} parent=0
    #allocation3 [shape = 'u8[65536]{0}', space=vmem, size = 0x10000, scoped, tag = 'input window, operand 0']
    #allocation4 [shape = 's32[2]{0}', space=sflag, size = 0x8, scoped, tag = 'scoped memory for tpu_custom_call.1']
    #allocation5 [shape = 's32[2]{0}', space=sflag, size = 0x8, scoped, tag = 'scoped memory for tpu_custom_call.1']
    #allocation6 [shape = 'u8[65536]{0}', space=vmem, size = 0x10000, scoped, tag = 'output window, operand 0']
    %6 = vsyncpa [#allocation4], 0
    %s7 = scalar_lea.sflag [#allocation4], 1
    %8 = vsyncpa %s7, 0
    %9 = vsyncpa [#allocation5], 0
    %s10 = scalar_lea.sflag [#allocation5], 1
    %11 = vsyncpa %s10, 0
    loop: start=0, step=1, limit=4
    $region2: #{tpu_custom_call.1} parent=1 // loop_pre_header
      _
    $region3: #{tpu_custom_call.1} parent=1 // loop_header
      %s13 = sphi 0, %s17
      %p14 = scmp.ge.s32.totalorder %s13, 4
      %s23 = sphi 0, %s25
      %s26 = sphi 0, %s23
      %s27 = sphi 0, %s26
      %s43 = sphi 0, %s27
      %s49 = sphi 0, %s51
      %s52 = sphi 0, %s49
      %s53 = sphi 0, %s52
      %s69 = sphi 0, %s53
    $region4: #{tpu_custom_call.1} parent=1 // loop_header_branch
      %16 = sbr.rel (%p14) target = $region8
    $region5: #{tpu_custom_call.1} parent=1 // loop_body
      %s18 = ssub.s32 %s13, 1
      %s19 = ssub.s32 %s13, 2
      %s20 = sadd.s32 %s13, 1
      %s21 = ssub.s32 %s13, %s20
      %p22 = scmp.eq.s32.totalorder %s21, 0
      %s24 = sadd.s32 %s23, 1
      %s25 = scalar_select %p22, %s23, %s24
      %p28 = pneg %p22
      %p29 = scmp.eq.s32.totalorder %s13, 1
      %p30 = por %p28, %p29
      %p31 = scmp.ne.s32.totalorder %s23, %s26
      %p32 = scmp.eq.s32.totalorder %s13, 0
      %p33 = por %p31, %p32
      %p34 = scmp.ne.s32.totalorder %s23, %s26
      %p35 = scmp.eq.s32.totalorder %s18, 1
      %p36 = por %p34, %p35
      %p37 = scmp.ne.s32.totalorder %s26, %s27
      %p38 = scmp.eq.s32.totalorder %s18, 0
      %p39 = por %p37, %p38
      %p40 = scmp.ne.s32.totalorder %s26, %s27
      %p41 = scmp.eq.s32.totalorder %s19, 1
      %p42 = por %p40, %p41
      %p44 = scmp.ne.s32.totalorder %s27, %s43
      %p45 = scmp.eq.s32.totalorder %s19, 0
      %p46 = por %p44, %p45
      %s47 = ssub.s32 %s13, %s20
      %p48 = scmp.eq.s32.totalorder %s47, 0
      %s50 = sadd.s32 %s49, 1
      %s51 = scalar_select %p48, %s49, %s50
      %p54 = pneg %p48
      %p55 = scmp.eq.s32.totalorder %s13, 1
      %p56 = por %p54, %p55
      %p57 = scmp.ne.s32.totalorder %s49, %s52
      %p58 = scmp.eq.s32.totalorder %s13, 0
      %p59 = por %p57, %p58
      %p60 = scmp.ne.s32.totalorder %s49, %s52
      %p61 = scmp.eq.s32.totalorder %s18, 1
      %p62 = por %p60, %p61
      %p63 = scmp.ne.s32.totalorder %s52, %s53
      %p64 = scmp.eq.s32.totalorder %s18, 0
      %p65 = por %p63, %p64
      %p66 = scmp.ne.s32.totalorder %s52, %s53
      %p67 = scmp.eq.s32.totalorder %s19, 1
      %p68 = por %p66, %p67
      %p70 = scmp.ne.s32.totalorder %s53, %s69
      %p71 = scmp.eq.s32.totalorder %s19, 0
      %p72 = por %p70, %p71
      %p73 = scmp.le.s32.totalorder 1, %s13
      %p74 = scmp.lt.s32.totalorder %s13, 3
      %p75 = pnand %p73, %p74
      %p76 = pneg %p75
      // Predicated region
      $region9: #{tpu_custom_call.1} parent=5 // pred_check
        _
      $region10: #{tpu_custom_call.1} parent=5 // pred_check_branch
        %78 = sbr.rel (%p75) target = $region12
      $region11: #{tpu_custom_call.1} parent=5 // pred_region
        %s79 = ssub.s32 %s13, 1
      $region12: #{tpu_custom_call.1} parent=5 // pred_fallthru
        _
      %p80 = scmp.lt.s32.totalorder %s13, 2
      // Predicated region
      $region13: #{tpu_custom_call.1} parent=5 // pred_check
        %p81 = pneg %p80
      $region14: #{tpu_custom_call.1} parent=5 // pred_check_branch
        %83 = sbr.rel (%p81) target = $region16
      $region15: #{tpu_custom_call.1} parent=5 // pred_region
        // Predicated region
        $region17: #{tpu_custom_call.1} parent=15 // pred_check
          %p84 = pneg %p33
        $region18: #{tpu_custom_call.1} parent=15 // pred_check_branch
          %86 = sbr.rel (%p84) target = $region20
        $region19: #{tpu_custom_call.1} parent=15 // pred_region
          %s87 = sand.u32 %s23, 1
          %s88 = scalar_lea.sflag [#allocation4], %s87
          %s89 = sand.u32 %s23, 1
          %s90 = smul.addr %s89, 64
          %s91 = scalar_lea.vmem [#allocation3], %s90
          %s92 = smul.u32 4, %s13
          %s94 = ssub.s32 1024, 1024
          %95 = vsyncadd %s88, %s94
          %s96 = smul.addr %s92, 2
          %s97 = smul.addr %s96, 128
          %s98 = scalar_lea.hbm %s0, %s97
          %s99 = sshll.u32 %s91, 4
          %s100 = int_to_ptr.vmem [resolvable:$true] %s99
          %105 = dma.hbm_to_vmem [thread:$0]  %s98, 1024, %s100, %s88, 128, 128, 8
        $region20: #{tpu_custom_call.1} parent=15 // pred_fallthru
          _
      $region16: #{tpu_custom_call.1} parent=5 // pred_fallthru
        _
      %p106 = scmp.le.s32.totalorder 1, %s13
      %p107 = scmp.lt.s32.totalorder %s13, 3
      %p108 = pnand %p106, %p107
      %p109 = pneg %p108
      // Predicated region
      $region21: #{tpu_custom_call.1} parent=5 // pred_check
        _
      $region22: #{tpu_custom_call.1} parent=5 // pred_check_branch
        %111 = sbr.rel (%p108) target = $region24
      $region23: #{tpu_custom_call.1} parent=5 // pred_region
        %s112 = ssub.s32 %s13, 1
        %s113 = sand.u32 %s26, 1
        %s114 = scalar_lea.sflag [#allocation4], %s113
        %s115 = sand.u32 %s26, 1
        %s116 = smul.addr %s115, 64
        %s117 = scalar_lea.vmem [#allocation3], %s116
        // Predicated region
        $region25: #{tpu_custom_call.1} parent=23 // pred_check
          %p118 = pneg %p39
        $region26: #{tpu_custom_call.1} parent=23 // pred_check_branch
          %120 = sbr.rel (%p118) target = $region28
        $region27: #{tpu_custom_call.1} parent=23 // pred_region
          %121 = dma.done %s114, 1024
        $region28: #{tpu_custom_call.1} parent=23 // pred_fallthru
          _
        %s122 = sand.u32 %s26, 1
        %s123 = scalar_lea.sflag [#allocation4], %s122
        %s124 = sand.u32 %s26, 1
        %s125 = smul.addr %s124, 64
        %s126 = scalar_lea.vmem [#allocation3], %s125
        %p127 = pneg %p39
        %p128 = pneg %p36
        %p129 = pneg %p65
        %p130 = pneg %p62
        %s131 = sand.u32 %s52, 1
        %s132 = scalar_lea.sflag [#allocation5], %s131
        %s133 = sand.u32 %s52, 1
        %s134 = smul.addr %s133, 64
        %s135 = scalar_lea.vmem [#allocation6], %s134
        %s136 = smul.u32 4, %s18
        %s137 = smul.u32 4, %s18
        %vm138 = vcmask 162816
        %139 = vst.msk [vmem:[#allocation2] sm:$0xff] %vm138, 0.0
        %140 = vst.msk [vmem:[#allocation2 + $0x8] sm:$0xff] %vm138, 0.0
        %vm141 = vcmask 158720
        %142 = vst.msk [vmem:[#allocation2 + $0x10] sm:$0xf] %vm141, 0.0
        %143 = vst.msk [vmem:[#allocation2 + $0x18] sm:$0xff] %vm138, 0.0
        %144 = vst.msk [vmem:[#allocation2 + $0x20] sm:$0xff] %vm138, 0.0
        %145 = vst.msk [vmem:[#allocation2 + $0x28] sm:$0xf] %vm141, 0.0
        %146 = vst.msk [vmem:[#allocation2 + $0x30] sm:$0xff] %vm138, 0.0
        %147 = vst.msk [vmem:[#allocation2 + $0x38] sm:$0xff] %vm138, 0.0
        %148 = vst.msk [vmem:[#allocation2 + $0x40] sm:$0xf] %vm141, 0.0
        %149 = vst.msk [vmem:[#allocation2 + $0x48] sm:$0xff] %vm138, 0.0
        %150 = vst.msk [vmem:[#allocation2 + $0x50] sm:$0xff] %vm138, 0.0
        %151 = vst.msk [vmem:[#allocation2 + $0x58] sm:$0xf] %vm141, 0.0
        %v152 = vld [vmem:[%s117] sm:$0xff]
        %v153 = vld [vmem:[%s117 + $0x8] sm:$0xff]
        %v154 = vld [vmem:[%s117 + $0x10] sm:$0xff]
        %v155 = vld [vmem:[%s117 + $0x18] sm:$0xff]
        %v156 = vld [vmem:[%s117 + $0x20] sm:$0xff]
        %v157 = vld [vmem:[%s117 + $0x28] sm:$0xff]
        %v158 = vld [vmem:[%s117 + $0x30] sm:$0xff]
        %v159 = vld [vmem:[%s117 + $0x38] sm:$0xff]
        %168 = vrot.lane.b32.xlu0 %v152, 2
        %v169 = vpop.permute.xlu0 %168
        %170 = vrot.lane.b32.xlu0 %v153, 2
        %v171 = vpop.permute.xlu0 %170
        %172 = vrot.lane.b32.xlu0 %v154, 2
        %v173 = vpop.permute.xlu0 %172
        %174 = vrot.lane.b32.xlu0 %v155, 2
        %v175 = vpop.permute.xlu0 %174
        %176 = vrot.lane.b32.xlu0 %v156, 2
        %v177 = vpop.permute.xlu0 %176
        %178 = vrot.lane.b32.xlu0 %v157, 2
        %v179 = vpop.permute.xlu0 %178
        %180 = vrot.lane.b32.xlu0 %v158, 2
        %v181 = vpop.permute.xlu0 %180
        %182 = vrot.lane.b32.xlu0 %v159, 2
        %v183 = vpop.permute.xlu0 %182
        %vm192 = vcmask 146448
        %193 = vst.msk [vmem:[#allocation2 + $0x2] sm:$0xff] %vm192, %v169
        %194 = vst.msk [vmem:[#allocation2 + $0xa] sm:$0xff] %vm192, %v171
        %195 = vst.msk [vmem:[#allocation2 + $0x1a] sm:$0xff] %vm192, %v173
        %196 = vst.msk [vmem:[#allocation2 + $0x22] sm:$0xff] %vm192, %v175
        %197 = vst.msk [vmem:[#allocation2 + $0x32] sm:$0xff] %vm192, %v177
        %198 = vst.msk [vmem:[#allocation2 + $0x3a] sm:$0xff] %vm192, %v179
        %199 = vst.msk [vmem:[#allocation2 + $0x4a] sm:$0xff] %vm192, %v181
        %200 = vst.msk [vmem:[#allocation2 + $0x52] sm:$0xff] %vm192, %v183
        %v201 = vld [vmem:[#allocation2] sm:$0xff]
        %v202 = vld [vmem:[#allocation2 + $0x8] sm:$0xff]
        %v203 = vld [vmem:[#allocation2 + $0x10] sm:$0xf]
        %v204 = vld [vmem:[#allocation2 + $0x18] sm:$0xff]
        %v205 = vld [vmem:[#allocation2 + $0x20] sm:$0xff]
        %v206 = vld [vmem:[#allocation2 + $0x28] sm:$0xf]
        %v207 = vld [vmem:[#allocation2 + $0x30] sm:$0xff]
        %v208 = vld [vmem:[#allocation2 + $0x38] sm:$0xff]
        %v209 = vld [vmem:[#allocation2 + $0x40] sm:$0xf]
        %v210 = vld [vmem:[#allocation2 + $0x48] sm:$0xff]
        %v211 = vld [vmem:[#allocation2 + $0x50] sm:$0xff]
        %v212 = vld [vmem:[#allocation2 + $0x58] sm:$0xf]
        %225 = vrot.lane.b32.xlu0 %v201, 127
        %v226 = vpop.permute.xlu0 %225
        %227 = vrot.lane.b32.xlu0 %v202, 127
        %v228 = vpop.permute.xlu0 %227
        %229 = vrot.lane.b32.xlu0 %v203, 127
        %v230 = vpop.permute.xlu0 %229
        %231 = vrot.lane.b32.xlu0 %v204, 127
        %v232 = vpop.permute.xlu0 %231
        %233 = vrot.lane.b32.xlu0 %v205, 127
        %v234 = vpop.permute.xlu0 %233
        %235 = vrot.lane.b32.xlu0 %v206, 127
        %v236 = vpop.permute.xlu0 %235
        %237 = vrot.lane.b32.xlu0 %v207, 127
        %v238 = vpop.permute.xlu0 %237
        %239 = vrot.lane.b32.xlu0 %v208, 127
        %v240 = vpop.permute.xlu0 %239
        %241 = vrot.lane.b32.xlu0 %v209, 127
        %v242 = vpop.permute.xlu0 %241
        %243 = vrot.lane.b32.xlu0 %v210, 127
        %v244 = vpop.permute.xlu0 %243
        %245 = vrot.lane.b32.xlu0 %v211, 127
        %v246 = vpop.permute.xlu0 %245
        %247 = vrot.lane.b32.xlu0 %v212, 127
        %v248 = vpop.permute.xlu0 %247
        %v261 = vadd.f32 %v201, %v226
        %v262 = vadd.f32 %v202, %v228
        %v263 = vadd.f32 %v203, %v230
        %v264 = vadd.f32 %v204, %v232
        %v265 = vadd.f32 %v205, %v234
        %v266 = vadd.f32 %v206, %v236
        %v267 = vadd.f32 %v207, %v238
        %v268 = vadd.f32 %v208, %v240
        %v269 = vadd.f32 %v209, %v242
        %v270 = vadd.f32 %v210, %v244
        %v271 = vadd.f32 %v211, %v246
        %v272 = vadd.f32 %v212, %v248
        %273 = vrot.lane.b32.xlu0 %v201, 126
        %v274 = vpop.permute.xlu0 %273
        %275 = vrot.lane.b32.xlu0 %v202, 126
        %v276 = vpop.permute.xlu0 %275
        %277 = vrot.lane.b32.xlu0 %v203, 126
        %v278 = vpop.permute.xlu0 %277
        %279 = vrot.lane.b32.xlu0 %v204, 126
        %v280 = vpop.permute.xlu0 %279
        %281 = vrot.lane.b32.xlu0 %v205, 126
        %v282 = vpop.permute.xlu0 %281
        %283 = vrot.lane.b32.xlu0 %v206, 126
        %v284 = vpop.permute.xlu0 %283
        %285 = vrot.lane.b32.xlu0 %v207, 126
        %v286 = vpop.permute.xlu0 %285
        %287 = vrot.lane.b32.xlu0 %v208, 126
        %v288 = vpop.permute.xlu0 %287
        %289 = vrot.lane.b32.xlu0 %v209, 126
        %v290 = vpop.permute.xlu0 %289
        %291 = vrot.lane.b32.xlu0 %v210, 126
        %v292 = vpop.permute.xlu0 %291
        %293 = vrot.lane.b32.xlu0 %v211, 126
        %v294 = vpop.permute.xlu0 %293
        %295 = vrot.lane.b32.xlu0 %v212, 126
        %v296 = vpop.permute.xlu0 %295
        %v309 = vadd.f32 %v261, %v274
        %v310 = vadd.f32 %v262, %v276
        %v311 = vadd.f32 %v263, %v278
        %v312 = vadd.f32 %v264, %v280
        %v313 = vadd.f32 %v265, %v282
        %v314 = vadd.f32 %v266, %v284
        %v315 = vadd.f32 %v267, %v286
        %v316 = vadd.f32 %v268, %v288
        %v317 = vadd.f32 %v269, %v290
        %v318 = vadd.f32 %v270, %v292
        %v319 = vadd.f32 %v271, %v294
        %v320 = vadd.f32 %v272, %v296
        %321 = vrot.lane.b32.xlu0 %v201, 125
        %v322 = vpop.permute.xlu0 %321
        %323 = vrot.lane.b32.xlu0 %v202, 125
        %v324 = vpop.permute.xlu0 %323
        %325 = vrot.lane.b32.xlu0 %v203, 125
        %v326 = vpop.permute.xlu0 %325
        %327 = vrot.lane.b32.xlu0 %v204, 125
        %v328 = vpop.permute.xlu0 %327
        %329 = vrot.lane.b32.xlu0 %v205, 125
        %v330 = vpop.permute.xlu0 %329
        %331 = vrot.lane.b32.xlu0 %v206, 125
        %v332 = vpop.permute.xlu0 %331
        %333 = vrot.lane.b32.xlu0 %v207, 125
        %v334 = vpop.permute.xlu0 %333
        %335 = vrot.lane.b32.xlu0 %v208, 125
        %v336 = vpop.permute.xlu0 %335
        %337 = vrot.lane.b32.xlu0 %v209, 125
        %v338 = vpop.permute.xlu0 %337
        %339 = vrot.lane.b32.xlu0 %v210, 125
        %v340 = vpop.permute.xlu0 %339
        %341 = vrot.lane.b32.xlu0 %v211, 125
        %v342 = vpop.permute.xlu0 %341
        %343 = vrot.lane.b32.xlu0 %v212, 125
        %v344 = vpop.permute.xlu0 %343
        %v357 = vadd.f32 %v309, %v322
        %v358 = vadd.f32 %v310, %v324
        %v359 = vadd.f32 %v311, %v326
        %v360 = vadd.f32 %v312, %v328
        %v361 = vadd.f32 %v313, %v330
        %v362 = vadd.f32 %v314, %v332
        %v363 = vadd.f32 %v315, %v334
        %v364 = vadd.f32 %v316, %v336
        %v365 = vadd.f32 %v317, %v338
        %v366 = vadd.f32 %v318, %v340
        %v367 = vadd.f32 %v319, %v342
        %v368 = vadd.f32 %v320, %v344
        %369 = vrot.lane.b32.xlu0 %v201, 124
        %v370 = vpop.permute.xlu0 %369
        %371 = vrot.lane.b32.xlu0 %v202, 124
        %v372 = vpop.permute.xlu0 %371
        %373 = vrot.lane.b32.xlu0 %v203, 124
        %v374 = vpop.permute.xlu0 %373
        %375 = vrot.lane.b32.xlu0 %v204, 124
        %v376 = vpop.permute.xlu0 %375
        %377 = vrot.lane.b32.xlu0 %v205, 124
        %v378 = vpop.permute.xlu0 %377
        %379 = vrot.lane.b32.xlu0 %v206, 124
        %v380 = vpop.permute.xlu0 %379
        %381 = vrot.lane.b32.xlu0 %v207, 124
        %v382 = vpop.permute.xlu0 %381
        %383 = vrot.lane.b32.xlu0 %v208, 124
        %v384 = vpop.permute.xlu0 %383
        %385 = vrot.lane.b32.xlu0 %v209, 124
        %v386 = vpop.permute.xlu0 %385
        %387 = vrot.lane.b32.xlu0 %v210, 124
        %v388 = vpop.permute.xlu0 %387
        %389 = vrot.lane.b32.xlu0 %v211, 124
        %v390 = vpop.permute.xlu0 %389
        %391 = vrot.lane.b32.xlu0 %v212, 124
        %v392 = vpop.permute.xlu0 %391
        %v405 = vadd.f32 %v357, %v370
        %v406 = vadd.f32 %v358, %v372
        %v407 = vadd.f32 %v359, %v374
        %v408 = vadd.f32 %v360, %v376
        %v409 = vadd.f32 %v361, %v378
        %v410 = vadd.f32 %v362, %v380
        %v411 = vadd.f32 %v363, %v382
        %v412 = vadd.f32 %v364, %v384
        %v413 = vadd.f32 %v365, %v386
        %v414 = vadd.f32 %v366, %v388
        %v415 = vadd.f32 %v367, %v390
        %v416 = vadd.f32 %v368, %v392
        %vm429 = vcmask 1046528
        %v430 = vrot.slane %v405, 1
        %v431 = vrot.slane %v406, 1
        %v432 = vsel %vm429, %v430, %v431
        %v433 = vrot.slane %v407, 1
        %v434 = vsel %vm429, %v431, %v433
        %v435 = vrot.slane %v408, 1
        %v436 = vrot.slane %v409, 1
        %v437 = vsel %vm429, %v435, %v436
        %v438 = vrot.slane %v410, 1
        %v439 = vsel %vm429, %v436, %v438
        %v440 = vrot.slane %v411, 1
        %v441 = vrot.slane %v412, 1
        %v442 = vsel %vm429, %v440, %v441
        %v443 = vrot.slane %v413, 1
        %v444 = vsel %vm429, %v441, %v443
        %v445 = vrot.slane %v414, 1
        %v446 = vrot.slane %v415, 1
        %v447 = vsel %vm429, %v445, %v446
        %v448 = vrot.slane %v416, 1
        %v449 = vsel %vm429, %v446, %v448
        %v458 = vadd.f32 %v405, %v432
        %v459 = vadd.f32 %v406, %v434
        %v460 = vadd.f32 %v408, %v437
        %v461 = vadd.f32 %v409, %v439
        %v462 = vadd.f32 %v411, %v442
        %v463 = vadd.f32 %v412, %v444
        %v464 = vadd.f32 %v414, %v447
        %v465 = vadd.f32 %v415, %v449
        %vm466 = vcmask 1045504
        %v467 = vrot.slane %v405, 2
        %v468 = vrot.slane %v406, 2
        %v469 = vsel %vm466, %v467, %v468
        %v470 = vrot.slane %v407, 2
        %v471 = vsel %vm466, %v468, %v470
        %v472 = vrot.slane %v408, 2
        %v473 = vrot.slane %v409, 2
        %v474 = vsel %vm466, %v472, %v473
        %v475 = vrot.slane %v410, 2
        %v476 = vsel %vm466, %v473, %v475
        %v477 = vrot.slane %v411, 2
        %v478 = vrot.slane %v412, 2
        %v479 = vsel %vm466, %v477, %v478
        %v480 = vrot.slane %v413, 2
        %v481 = vsel %vm466, %v478, %v480
        %v482 = vrot.slane %v414, 2
        %v483 = vrot.slane %v415, 2
        %v484 = vsel %vm466, %v482, %v483
        %v485 = vrot.slane %v416, 2
        %v486 = vsel %vm466, %v483, %v485
        %v495 = vadd.f32 %v458, %v469
        %v496 = vadd.f32 %v459, %v471
        %v497 = vadd.f32 %v460, %v474
        %v498 = vadd.f32 %v461, %v476
        %v499 = vadd.f32 %v462, %v479
        %v500 = vadd.f32 %v463, %v481
        %v501 = vadd.f32 %v464, %v484
        %v502 = vadd.f32 %v465, %v486
        %vm503 = vcmask 1044480
        %v504 = vrot.slane %v405, 3
        %v505 = vrot.slane %v406, 3
        %v506 = vsel %vm503, %v504, %v505
        %v507 = vrot.slane %v407, 3
        %v508 = vsel %vm503, %v505, %v507
        %v509 = vrot.slane %v408, 3
        %v510 = vrot.slane %v409, 3
        %v511 = vsel %vm503, %v509, %v510
        %v512 = vrot.slane %v410, 3
        %v513 = vsel %vm503, %v510, %v512
        %v514 = vrot.slane %v411, 3
        %v515 = vrot.slane %v412, 3
        %v516 = vsel %vm503, %v514, %v515
        %v517 = vrot.slane %v413, 3
        %v518 = vsel %vm503, %v515, %v517
        %v519 = vrot.slane %v414, 3
        %v520 = vrot.slane %v415, 3
        %v521 = vsel %vm503, %v519, %v520
        %v522 = vrot.slane %v416, 3
        %v523 = vsel %vm503, %v520, %v522
        %v532 = vadd.f32 %v495, %v506
        %v533 = vadd.f32 %v496, %v508
        %v534 = vadd.f32 %v497, %v511
        %v535 = vadd.f32 %v498, %v513
        %v536 = vadd.f32 %v499, %v516
        %v537 = vadd.f32 %v500, %v518
        %v538 = vadd.f32 %v501, %v521
        %v539 = vadd.f32 %v502, %v523
        %vm540 = vcmask 1043456
        %v541 = vrot.slane %v405, 4
        %v542 = vrot.slane %v406, 4
        %v543 = vsel %vm540, %v541, %v542
        %v544 = vrot.slane %v407, 4
        %v545 = vsel %vm540, %v542, %v544
        %v546 = vrot.slane %v408, 4
        %v547 = vrot.slane %v409, 4
        %v548 = vsel %vm540, %v546, %v547
        %v549 = vrot.slane %v410, 4
        %v550 = vsel %vm540, %v547, %v549
        %v551 = vrot.slane %v411, 4
        %v552 = vrot.slane %v412, 4
        %v553 = vsel %vm540, %v551, %v552
        %v554 = vrot.slane %v413, 4
        %v555 = vsel %vm540, %v552, %v554
        %v556 = vrot.slane %v414, 4
        %v557 = vrot.slane %v415, 4
        %v558 = vsel %vm540, %v556, %v557
        %v559 = vrot.slane %v416, 4
        %v560 = vsel %vm540, %v557, %v559
        %v569 = vadd.f32 %v532, %v543
        %v570 = vadd.f32 %v533, %v545
        %v571 = vadd.f32 %v534, %v548
        %v572 = vadd.f32 %v535, %v550
        %v573 = vadd.f32 %v536, %v553
        %v574 = vadd.f32 %v537, %v555
        %v575 = vadd.f32 %v538, %v558
        %v576 = vadd.f32 %v539, %v560
        %v577 = vmul.f32 %v569, 0.04
        %v578 = vmul.f32 %v570, 0.04
        %v579 = vmul.f32 %v571, 0.04
        %v580 = vmul.f32 %v572, 0.04
        %v581 = vmul.f32 %v573, 0.04
        %v582 = vmul.f32 %v574, 0.04
        %v583 = vmul.f32 %v575, 0.04
        %v584 = vmul.f32 %v576, 0.04
        %vm585 = vcmask 130048
        %586 = vst.msk [vmem:[%s135] sm:$0xff] %vm585, %v577
        %587 = vst.msk [vmem:[%s135 + $0x8] sm:$0xff] %vm585, %v578
        %588 = vst.msk [vmem:[%s135 + $0x10] sm:$0xff] %vm585, %v579
        %589 = vst.msk [vmem:[%s135 + $0x18] sm:$0xff] %vm585, %v580
        %590 = vst.msk [vmem:[%s135 + $0x20] sm:$0xff] %vm585, %v581
        %591 = vst.msk [vmem:[%s135 + $0x28] sm:$0xff] %vm585, %v582
        %592 = vst.msk [vmem:[%s135 + $0x30] sm:$0xff] %vm585, %v583
        %593 = vst.msk [vmem:[%s135 + $0x38] sm:$0xff] %vm585, %v584
        %s594 = sand.u32 %s52, 1
        %s595 = scalar_lea.sflag [#allocation5], %s594
        %s596 = sand.u32 %s52, 1
        %s597 = smul.addr %s596, 64
        %s598 = scalar_lea.vmem [#allocation6], %s597
        // Predicated region
        $region29: #{tpu_custom_call.1} parent=23 // pred_check
          %p599 = pneg %p62
        $region30: #{tpu_custom_call.1} parent=23 // pred_check_branch
          %601 = sbr.rel (%p599) target = $region32
        $region31: #{tpu_custom_call.1} parent=23 // pred_region
          %s602 = smul.u32 4, %s18
          %s604 = ssub.s32 1024, 1024
          %605 = vsyncadd %s595, %s604
          %s606 = smul.addr %s602, 2
          %s607 = smul.addr %s606, 128
          %s608 = scalar_lea.hbm %s1, %s607
          %s609 = sshll.u32 %s598, 4
          %s610 = int_to_ptr.vmem [resolvable:$true] %s609
          %615 = dma.vmem_to_hbm [thread:$0]  %s610, 1024, %s608, %s595, 128, 128, 8
        $region32: #{tpu_custom_call.1} parent=23 // pred_fallthru
          _
      $region24: #{tpu_custom_call.1} parent=5 // pred_fallthru
        _
      %p616 = scmp.le.s32.totalorder 2, %s13
      // Predicated region
      $region33: #{tpu_custom_call.1} parent=5 // pred_check
        %p617 = pneg %p616
      $region34: #{tpu_custom_call.1} parent=5 // pred_check_branch
        %619 = sbr.rel (%p617) target = $region36
      $region35: #{tpu_custom_call.1} parent=5 // pred_region
        %s620 = ssub.s32 %s13, 2
        // Predicated region
        $region37: #{tpu_custom_call.1} parent=35 // pred_check
          %p621 = pneg %p68
        $region38: #{tpu_custom_call.1} parent=35 // pred_check_branch
          %623 = sbr.rel (%p621) target = $region40
        $region39: #{tpu_custom_call.1} parent=35 // pred_region
          %s624 = sand.u32 %s53, 1
          %s625 = scalar_lea.sflag [#allocation5], %s624
          %s626 = sand.u32 %s53, 1
          %s627 = smul.addr %s626, 64
          %s628 = scalar_lea.vmem [#allocation6], %s627
          %629 = dma.done %s625, 1024
        $region40: #{tpu_custom_call.1} parent=35 // pred_fallthru
          _
      $region36: #{tpu_custom_call.1} parent=5 // pred_fallthru
        _
    $region6: #{tpu_custom_call.1} parent=1 // loop_footer
      %s17 = sadd.s32 1, %s13
    $region7: #{tpu_custom_call.1} parent=1 // loop_footer_branch
      %12 = sbr.rel target = $region3
    $region8: #{tpu_custom_call.1} parent=1 // loop_exit
      _
    %630 = vsyncpa [#allocation4], 1
    %s631 = scalar_lea.sflag [#allocation4], 1
    %632 = vsyncpa %s631, 1
    %633 = vsyncpa [#allocation5], 1
    %s634 = scalar_lea.sflag [#allocation5], 1
    %635 = vsyncpa %s634, 1

</llo_original>
